<compile_context>
chip_gen: v7x
topology: tpu7x:2x2x1
jax: 0.10.0
libtpu: 0.0.40
codegen_flags: <defaults>
</compile_context>

<pallas_src>
import functools

import jax
import jax.numpy as jnp
from jax.experimental import pallas as pl
from jax.experimental.pallas import tpu as pltpu


def _round_up(x: int, m: int) -> int:
    return ((x + m - 1) // m) * m


def _tile_and_pad(dim: int, align: int, max_tile: int):
    """Pick a tile (multiple of `align`, <= max_tile) and the padded extent."""
    padded = _round_up(dim, align)
    tile = min(_round_up(max_tile, align), padded)
    padded = _round_up(padded, tile)
    return tile, padded


# -----------------------------------------------------------------------------
# Kernels
# -----------------------------------------------------------------------------
def _matmul_bias_kernel(x_ref, w_ref, b_ref, o_ref):
    """Full-K-resident tile: single MXU matmul + fused bias, no accumulator."""
    o_ref[...] = (
        jnp.dot(x_ref[...], w_ref[...], preferred_element_type=jnp.float32)
        + b_ref[...]
    ).astype(o_ref.dtype)


def _matmul_bias_acc_kernel(x_ref, w_ref, b_ref, o_ref, acc_ref):
    """K tiled on grid axis 2 (reduction last); f32 accumulator in VMEM."""
    k = pl.program_id(2)

    @pl.when(k == 0)
    def _():
        acc_ref[...] = jnp.zeros_like(acc_ref)

    acc_ref[...] += jnp.dot(
        x_ref[...], w_ref[...], preferred_element_type=jnp.float32
    )

    @pl.when(k == pl.num_programs(2) - 1)
    def _():
        # bias tile is (1, tn); broadcasts over the tm rows, added in f32.
        o_ref[...] = (acc_ref[...] + b_ref[...]).astype(o_ref.dtype)


# -----------------------------------------------------------------------------
# Linear wrapper: tile selection + padding + pallas_call
# -----------------------------------------------------------------------------
@functools.partial(jax.jit, static_argnames=("tm_max", "tn_max", "tk_max"))
def _linear(x2d, w_t, bias, *, tm_max=256, tn_max=512, tk_max=2048):
    """y = x2d @ w_t + bias.   x2d: (M,K), w_t: (K,N) pre-transposed, bias: (1,N)."""
    M, K = x2d.shape
    Kw, N = w_t.shape
    assert K == Kw, (K, Kw)

    tm, Mp = _tile_and_pad(M, 8, tm_max)
    tn, Np = _tile_and_pad(N, 128, tn_max)
    tk, Kp = _tile_and_pad(K, 128, tk_max)

    # Pad (zeros) so the grid divides evenly; zero K-padding adds nothing to
    # the dot product, padded M/N rows/cols are sliced off below.
    if (Mp, Kp) != (M, K):
        x2d = jnp.pad(x2d, ((0, Mp - M), (0, Kp - K)))
    if (Kp, Np) != (K, N):
        w_t = jnp.pad(w_t, ((0, Kp - K), (0, Np - N)))
    if Np != N:
        bias = jnp.pad(bias, ((0, 0), (0, Np - N)))

    grid_m, grid_n, grid_k = Mp // tm, Np // tn, Kp // tk

    if grid_k == 1:
        # K resident in a single tile: no reduction axis, no accumulator.
        y = pl.pallas_call(
            _matmul_bias_kernel,
            out_shape=jax.ShapeDtypeStruct((Mp, Np), x2d.dtype),
            grid_spec=pltpu.PrefetchScalarGridSpec(
                num_scalar_prefetch=0,
                grid=(grid_m, grid_n),
                in_specs=[
                    pl.BlockSpec((tm, Kp), lambda i, j: (i, 0)),
                    pl.BlockSpec((Kp, tn), lambda i, j: (0, j)),
                    pl.BlockSpec((1, tn), lambda i, j: (0, j)),
                ],
                out_specs=pl.BlockSpec((tm, tn), lambda i, j: (i, j)),
            ),
            compiler_params=pltpu.CompilerParams(
                dimension_semantics=("parallel", "parallel")
            ),
        )(x2d, w_t, bias)
    else:
        y = pl.pallas_call(
            _matmul_bias_acc_kernel,
            out_shape=jax.ShapeDtypeStruct((Mp, Np), x2d.dtype),
            grid_spec=pltpu.PrefetchScalarGridSpec(
                num_scalar_prefetch=0,
                grid=(grid_m, grid_n, grid_k),
                in_specs=[
                    pl.BlockSpec((tm, tk), lambda i, j, k: (i, k)),
                    pl.BlockSpec((tk, tn), lambda i, j, k: (k, j)),
                    pl.BlockSpec((1, tn), lambda i, j, k: (0, j)),
                ],
                out_specs=pl.BlockSpec((tm, tn), lambda i, j, k: (i, j)),
                scratch_shapes=[pltpu.VMEM((tm, tn), jnp.float32)],
            ),
            compiler_params=pltpu.CompilerParams(
                dimension_semantics=("parallel", "parallel", "arbitrary")
            ),
        )(x2d, w_t, bias)

    if (Mp, Np) != (M, N):
        y = y[:M, :N]
    return y


# -----------------------------------------------------------------------------
# Parameter preparation (one-time, hoisted out of the forward hot path)
# -----------------------------------------------------------------------------
def prepare_input_projection_params(params, compute_dtype=None):
    """Pre-transpose/cast weights once and build the fused (K, 3N) QKV weight.

    `params`: dict with 'wq','wk','wv' in PyTorch layout (out_features,
    in_features) and optional 'bq','bk','bv' of shape (out_features,).
    `compute_dtype`: e.g. jnp.bfloat16 to use the fast MXU path (f32 accum).
    """
    def prep(w, b):
        w = jnp.asarray(w)
        n_out = w.shape[0]
        w_t = w.T  # (in_features, out_features)
        if compute_dtype is not None:
            w_t = w_t.astype(compute_dtype)
        if b is None:
            b2 = jnp.zeros((1, n_out), jnp.float32)
        else:
            b2 = jnp.asarray(b, jnp.float32).reshape(1, n_out)
        return w_t, b2

    wq_t, bq = prep(params["wq"], params.get("bq"))
    wk_t, bk = prep(params["wk"], params.get("bk"))
    wv_t, bv = prep(params["wv"], params.get("bv"))

    prepared = {
        "compute_dtype": compute_dtype,
        "wq_t": wq_t, "bq": bq,
        "wk_t": wk_t, "bk": bk,
        "wv_t": wv_t, "bv": bv,
        "out_features": (wq_t.shape[1], wk_t.shape[1], wv_t.shape[1]),
    }
    # Fused QKV weight/bias, usable when query is key is value (self-attn).
    if wq_t.shape[0] == wk_t.shape[0] == wv_t.shape[0]:
        prepared["w_qkv_t"] = jnp.concatenate([wq_t, wk_t, wv_t], axis=1)
        prepared["b_qkv"] = jnp.concatenate([bq, bk, bv], axis=1)
    return prepared


# -----------------------------------------------------------------------------
# Public forward
# -----------------------------------------------------------------------------
def input_projection(query, key, value, params, *,
                     tm_max=256, tn_max=512, tk_max=2048):
    """Pallas equivalent of InputProjection.forward (default path).

    `params` is either the output of prepare_input_projection_params()
    (preferred: weights transposed/cast once at load time) or a raw
    {'wq','bq','wk','bk','wv','bv'} dict. Returns (q, k, v), each
    [B, S, out_features].
    """
    if "wq_t" not in params:
        params = prepare_input_projection_params(params)

    dtype = params["compute_dtype"]
    kwargs = dict(tm_max=tm_max, tn_max=tn_max, tk_max=tk_max)

    def to2d(x):
        x2d = x.reshape(-1, x.shape[-1])
        if dtype is not None:
            x2d = x2d.astype(dtype)
        return x2d

    # TODO(synk): LoRA adapters and qk FusedLayerNorm (both disabled by
    # default in the reference config) are not implemented here.

    if (query is key) and (key is value) and ("w_qkv_t" in params):
        # Self-attention fast path: ONE pallas_call over the fused (K, 3N)
        # weight -> activations read once, wide output stores, single launch.
        B, S, _ = query.shape
        y = _linear(to2d(query), params["w_qkv_t"], params["b_qkv"], **kwargs)
        nq, nk, nv = params["out_features"]
        q = y[:, :nq].reshape(B, S, nq)
        k = y[:, nq:nq + nk].reshape(B, S, nk)
        v = y[:, nq + nk:nq + nk + nv].reshape(B, S, nv)
        return q, k, v

    outs = []
    for x, w_t, b in (
        (query, params["wq_t"], params["bq"]),
        (key, params["wk_t"], params["bk"]),
        (value, params["wv_t"], params["bv"]),
    ):
        B, S, _ = x.shape
        y = _linear(to2d(x), w_t, b, **kwargs)
        outs.append(y.reshape(B, S, -1))
    return tuple(outs)


if __name__ == "__main__":
    B, S = 2, 8
    in_features, out_features = 256, 128

    root = jax.random.PRNGKey(0)
    kq, kk, kv, kwq, kwk, kwv, kbq, kbk, kbv = jax.random.split(root, 9)

    query = jax.random.normal(kq, (B, S, in_features), dtype=jnp.float32)
    key_in = jax.random.normal(kk, (B, S, in_features), dtype=jnp.float32)
    value = jax.random.normal(kv, (B, S, in_features), dtype=jnp.float32)

    scale = 1.0 / jnp.sqrt(in_features)
    params = {
        "wq": jax.random.uniform(kwq, (out_features, in_features), minval=-scale, maxval=scale),
        "wk": jax.random.uniform(kwk, (out_features, in_features), minval=-scale, maxval=scale),
        "wv": jax.random.uniform(kwv, (out_features, in_features), minval=-scale, maxval=scale),
        "bq": jax.random.uniform(kbq, (out_features,), minval=-scale, maxval=scale),
        "bk": jax.random.uniform(kbk, (out_features,), minval=-scale, maxval=scale),
        "bv": jax.random.uniform(kbv, (out_features,), minval=-scale, maxval=scale),
    }

    # One-time preparation: transpose + bias reshape hoisted off the hot path.
    prepared = prepare_input_projection_params(params)

    # Reference (plain JAX, same math as torch.nn.functional.linear).
    def ref(x, w, b):
        return jnp.einsum("bsf,of->bso", x, w) + b

    # 1) General (cross-attention) path: distinct q/k/v tensors.
    q_out, k_out, v_out = input_projection(query, key_in, value, prepared)
    jax.block_until_ready((q_out, k_out, v_out))
    assert q_out.shape == (B, S, out_features)
    assert jnp.allclose(q_out, ref(query, params["wq"], params["bq"]), atol=1e-4)
    assert jnp.allclose(k_out, ref(key_in, params["wk"], params["bk"]), atol=1e-4)
    assert jnp.allclose(v_out, ref(value, params["wv"], params["bv"]), atol=1e-4)

    # 2) Fused self-attention path: same tensor for q/k/v -> single pallas_call.
    q2, k2, v2 = input_projection(query, query, query, prepared)
    jax.block_until_ready((q2, k2, v2))
    assert jnp.allclose(q2, ref(query, params["wq"], params["bq"]), atol=1e-4)
    assert jnp.allclose(k2, ref(query, params["wk"], params["bk"]), atol=1e-4)
    assert jnp.allclose(v2, ref(query, params["wv"], params["bv"]), atol=1e-4)

    # 3) Exercise the K-reduction (accumulator) kernel variant by forcing a
    #    small K tile (K=256 -> two reduction steps).
    q3, k3, v3 = input_projection(query, query, query, prepared, tk_max=128)
    jax.block_until_ready((q3, k3, v3))
    assert jnp.allclose(q3, ref(query, params["wq"], params["bq"]), atol=1e-4)
    assert jnp.allclose(v3, ref(query, params["wv"], params["bv"]), atol=1e-4)

    print("KERNEL_OK")
</pallas_src>

<mosaic_0001>
module attributes {stable_mosaic.version = 11 : i64} {
  func.func @_matmul_bias_kernel(%arg0: i32, %arg1: i32, %arg2: memref<16x256xf32, #tpu.memory_space<vmem>>, %arg3: memref<256x128xf32, #tpu.memory_space<vmem>>, %arg4: memref<1x128xf32, #tpu.memory_space<vmem>>, %arg5: memref<16x128xf32, #tpu.memory_space<vmem>>) attributes {dimension_semantics = [#tpu.dimension_semantics<parallel>, #tpu.dimension_semantics<parallel>], iteration_bounds = array<i64: 1, 1>, scalar_prefetch = 0 : i64, scratch_operands = 0 : i64, tpu.core_type = #tpu.core_type<tc>, window_params = [{transform_indices = @transform_0, window_bounds = array<i64: 16, 256>}, {transform_indices = @transform_1, window_bounds = array<i64: 256, 128>}, {transform_indices = @transform_2, window_bounds = array<i64: 1, 128>}, {transform_indices = @transform_3, window_bounds = array<i64: 16, 128>}]} {
    %c0 = arith.constant 0 : index
    %c0_0 = arith.constant 0 : index
    %0 = vector.load %arg2[%c0, %c0_0] : memref<16x256xf32, #tpu.memory_space<vmem>>, vector<16x256xf32>
    %c0_1 = arith.constant 0 : index
    %c0_2 = arith.constant 0 : index
    %1 = vector.load %arg3[%c0_1, %c0_2] : memref<256x128xf32, #tpu.memory_space<vmem>>, vector<256x128xf32>
    %cst = arith.constant dense<0.000000e+00> : vector<16x128xf32>
    %2 = tpu.matmul %0, %1, %cst {dimension_numbers = #tpu.dot_dimension_numbers<[1], [0], [0], [1], [0, 0, 1, 1], [], []>} : vector<16x256xf32>, vector<256x128xf32>, vector<16x128xf32> -> vector<16x128xf32>
    %c0_3 = arith.constant 0 : index
    %c0_4 = arith.constant 0 : index
    %3 = vector.load %arg4[%c0_3, %c0_4] : memref<1x128xf32, #tpu.memory_space<vmem>>, vector<1x128xf32>
    %4 = vector.broadcast %3 : vector<1x128xf32> to vector<16x128xf32>
    %5 = arith.addf %2, %4 : vector<16x128xf32>
    %c0_5 = arith.constant 0 : index
    %c0_6 = arith.constant 0 : index
    %6 = vector.load %arg5[%c0_5, %c0_6] : memref<16x128xf32, #tpu.memory_space<vmem>>, vector<16x128xf32>
    tpu.vector_store %arg5[%c0_5, %c0_6], %5 {strides = array<i32>} : memref<16x128xf32, #tpu.memory_space<vmem>>, vector<16x128xf32>,
    return
  }
  func.func @transform_0(%arg0: i32, %arg1: i32) -> (i32, i32) {
    %c0_i32 = arith.constant 0 : i32
    %c0_i32_0 = arith.constant 0 : i32
    return %arg0, %c0_i32 : i32, i32
  }
  func.func @transform_1(%arg0: i32, %arg1: i32) -> (i32, i32) {
    %c0_i32 = arith.constant 0 : i32
    %c0_i32_0 = arith.constant 0 : i32
    return %c0_i32, %arg1 : i32, i32
  }
  func.func @transform_2(%arg0: i32, %arg1: i32) -> (i32, i32) {
    %c0_i32 = arith.constant 0 : i32
    %c0_i32_0 = arith.constant 0 : i32
    return %c0_i32, %arg1 : i32, i32
  }
  func.func @transform_3(%arg0: i32, %arg1: i32) -> (i32, i32) {
    %c0_i32 = arith.constant 0 : i32
    return %arg0, %arg1 : i32, i32
  }
}

</mosaic_0001>

<llo_original>
// kernel: _linear.1
$region0: #{_linear.1}
  #allocation0 [shape = 'u32[]', space=smem, size = 0x4, offset = 0x4, fixed_abs, tag = 'smem constant byte address 0x4 - core index']
  #allocation1 [shape = 'u32[144,128]{1,0:T(1,128)}', space=vmem, size = 0x12000, scoped, tag = 'internal scratch']
  %s0 = inlined_call_operand.hbm [shape: f32[16,256], index: 0, kind: input, shape index: {}]
  %s1 = inlined_call_operand.hbm [shape: f32[256,128], index: 1, kind: input, shape index: {}]
  %s2 = inlined_call_operand.vmem [shape: f32[1,128], index: 2, kind: input, shape index: {}]
  %s3 = inlined_call_operand.hbm [shape: f32[16,128], index: 3, kind: output, shape index: {}]
  %s4 = sld [smem:[#allocation0]]
  $region30: #{_linear.1} parent=0
    _
  %s6 = ssub.s32 1, %s4
  %s7 = scalar_select 0, %s6, %s4
  $region1: #{_linear.1} parent=0
    #allocation2 [shape = 'u8[16384]{0}', space=vmem, size = 0x4000, scoped, tag = 'input window, operand 0, single buffered']
    #allocation3 [shape = 's32[1]{0}', space=sflag, size = 0x4, scoped, tag = 'scoped memory for _linear.1']
    #allocation4 [shape = 's32[1]{0}', space=sflag, size = 0x4, scoped, tag = 'scoped memory for _linear.1']
    #allocation5 [shape = 'u8[131072]{0}', space=vmem, size = 0x20000, scoped, tag = 'input window, operand 1, single buffered']
    #allocation6 [shape = 's32[1]{0}', space=sflag, size = 0x4, scoped, tag = 'scoped memory for _linear.1']
    #allocation7 [shape = 'u8[8192]{0}', space=vmem, size = 0x2000, scoped, tag = 'output window, operand 0, single buffered']
    %8 = vsyncpa [#allocation3], 0
    %9 = vsyncpa [#allocation6], 0
    %10 = vsyncpa [#allocation4], 0
    // Predicated region
    $region2: #{_linear.1} parent=1 // pred_check
      _
    $region3: #{_linear.1} parent=1 // pred_check_branch
      %12 = sbr.rel (0) target = $region5
    $region4: #{_linear.1} parent=1 // pred_region
      %s14 = ssub.s32 512, 512
      %15 = vsyncadd [#allocation3], %s14
      %s16 = sshll.u32 [#allocation2], 4
      %s17 = int_to_ptr.vmem [resolvable:$true] %s16
      %22 = dma.hbm_to_vmem [thread:$0]  %s0, 512, %s17, [#allocation3], 256, 256, 16
    $region5: #{_linear.1} parent=1 // pred_fallthru
      _
    // Predicated region
    $region6: #{_linear.1} parent=1 // pred_check
      _
    $region7: #{_linear.1} parent=1 // pred_check_branch
      %24 = sbr.rel (0) target = $region9
    $region8: #{_linear.1} parent=1 // pred_region
      %s26 = ssub.s32 4096, 4096
      %27 = vsyncadd [#allocation6], %s26
      %s28 = sshll.u32 [#allocation5], 4
      %s29 = int_to_ptr.vmem [resolvable:$true] %s28
      %34 = dma.hbm_to_vmem [thread:$0]  %s1, 4096, %s29, [#allocation6], 128, 128, 8
    $region9: #{_linear.1} parent=1 // pred_fallthru
      _
    // Predicated region
    $region10: #{_linear.1} parent=1 // pred_check
      _
    $region11: #{_linear.1} parent=1 // pred_check_branch
      %36 = sbr.rel (0) target = $region13
    $region12: #{_linear.1} parent=1 // pred_region
      _
    $region13: #{_linear.1} parent=1 // pred_fallthru
      _
    // Predicated region
    $region14: #{_linear.1} parent=1 // pred_check
      _
    $region15: #{_linear.1} parent=1 // pred_check_branch
      %38 = sbr.rel (0) target = $region17
    $region16: #{_linear.1} parent=1 // pred_region
      %39 = dma.done [#allocation3], 512
    $region17: #{_linear.1} parent=1 // pred_fallthru
      _
    // Predicated region
    $region18: #{_linear.1} parent=1 // pred_check
      _
    $region19: #{_linear.1} parent=1 // pred_check_branch
      %41 = sbr.rel (0) target = $region21
    $region20: #{_linear.1} parent=1 // pred_region
      %42 = dma.done [#allocation6], 4096
    $region21: #{_linear.1} parent=1 // pred_fallthru
      _
    %v43 = vld [vmem:[#allocation2] sm:$0xff]
    %v44 = vld [vmem:[#allocation2 + $0x8] sm:$0xff]
    %v45 = vld [vmem:[#allocation2 + $0x10] sm:$0xff]
    %v46 = vld [vmem:[#allocation2 + $0x18] sm:$0xff]
    %v47 = vld [vmem:[#allocation5] sm:$0xff]
    %v48 = vld [vmem:[#allocation5 + $0x8] sm:$0xff]
    %v49 = vld [vmem:[#allocation5 + $0x10] sm:$0xff]
    %v50 = vld [vmem:[#allocation5 + $0x18] sm:$0xff]
    %v51 = vld [vmem:[#allocation5 + $0x20] sm:$0xff]
    %v52 = vld [vmem:[#allocation5 + $0x28] sm:$0xff]
    %v53 = vld [vmem:[#allocation5 + $0x30] sm:$0xff]
    %v54 = vld [vmem:[#allocation5 + $0x38] sm:$0xff]
    %v55 = vld [vmem:[#allocation5 + $0x40] sm:$0xff]
    %v56 = vld [vmem:[#allocation5 + $0x48] sm:$0xff]
    %v57 = vld [vmem:[#allocation5 + $0x50] sm:$0xff]
    %v58 = vld [vmem:[#allocation5 + $0x58] sm:$0xff]
    %v59 = vld [vmem:[#allocation5 + $0x60] sm:$0xff]
    %v60 = vld [vmem:[#allocation5 + $0x68] sm:$0xff]
    %v61 = vld [vmem:[#allocation5 + $0x70] sm:$0xff]
    %v62 = vld [vmem:[#allocation5 + $0x78] sm:$0xff]
    %v63 = vld [vmem:[#allocation5 + $0x80] sm:$0xff]
    %v64 = vld [vmem:[#allocation5 + $0x88] sm:$0xff]
    %v65 = vld [vmem:[#allocation5 + $0x90] sm:$0xff]
    %v66 = vld [vmem:[#allocation5 + $0x98] sm:$0xff]
    %v67 = vld [vmem:[#allocation5 + $0xa0] sm:$0xff]
    %v68 = vld [vmem:[#allocation5 + $0xa8] sm:$0xff]
    %v69 = vld [vmem:[#allocation5 + $0xb0] sm:$0xff]
    %v70 = vld [vmem:[#allocation5 + $0xb8] sm:$0xff]
    %v71 = vld [vmem:[#allocation5 + $0xc0] sm:$0xff]
    %v72 = vld [vmem:[#allocation5 + $0xc8] sm:$0xff]
    %v73 = vld [vmem:[#allocation5 + $0xd0] sm:$0xff]
    %v74 = vld [vmem:[#allocation5 + $0xd8] sm:$0xff]
    %v75 = vld [vmem:[#allocation5 + $0xe0] sm:$0xff]
    %v76 = vld [vmem:[#allocation5 + $0xe8] sm:$0xff]
    %v77 = vld [vmem:[#allocation5 + $0xf0] sm:$0xff]
    %v78 = vld [vmem:[#allocation5 + $0xf8] sm:$0xff]
    %v79 = vld [vmem:[%s2] sm:$0x1]
    %v81 = vlaneseq
    %v82 = vshrl.u32 %v81, 7
    %v83 = vsub.s32 0, %v82
    %v84 = vrot.slane %v79, %v83
    %86 = vmatprep.subr.mxu0 0.0
    %87 = vmatpush1.msra.mxu0 %v47
    %88 = vmatprep.subr.mxu0 0.0
    %89 = vmatpush1.msra.mxu0 %v48
    %90 = vmatprep.subr.mxu0 0.0
    %91 = vmatpush1.msra.mxu0 %v49
    %92 = vmatprep.subr.mxu0 0.0
    %93 = vmatpush1.msra.mxu0 %v50
    %94 = vmatprep.subr.mxu0 0.0
    %95 = vmatpush1.msra.mxu0 %v51
    %96 = vmatprep.subr.mxu0 0.0
    %97 = vmatpush1.msra.mxu0 %v52
    %98 = vmatprep.subr.mxu0 0.0
    %99 = vmatpush1.msra.mxu0 %v53
    %100 = vmatprep.subr.mxu0 0.0
    %101 = vmatpush1.msra.mxu0 %v54
    %102 = vmatprep.subr.mxu0 0.0
    %103 = vmatpush1.msra.mxu0 %v55
    %104 = vmatprep.subr.mxu0 0.0
    %105 = vmatpush1.msra.mxu0 %v56
    %106 = vmatprep.subr.mxu0 0.0
    %107 = vmatpush1.msra.mxu0 %v57
    %108 = vmatprep.subr.mxu0 0.0
    %109 = vmatpush1.msra.mxu0 %v58
    %110 = vmatprep.subr.mxu0 0.0
    %111 = vmatpush1.msra.mxu0 %v59
    %112 = vmatprep.subr.mxu0 0.0
    %113 = vmatpush1.msra.mxu0 %v60
    %114 = vmatprep.subr.mxu0 0.0
    %115 = vmatpush1.msra.mxu0 %v61
    %116 = vmatprep.subr.mxu0 0.0
    %117 = vmatpush1.msra.mxu0 %v62
    %118 = vmatprep.subr.mxu0 0.0
    %119 = vmatpush1.msra.mxu0 %v63
    %120 = vmatprep.subr.mxu0 0.0
    %121 = vmatpush1.msra.mxu0 %v64
    %122 = vmatprep.subr.mxu0 0.0
    %123 = vmatpush1.msra.mxu0 %v65
    %124 = vmatprep.subr.mxu0 0.0
    %125 = vmatpush1.msra.mxu0 %v66
    %126 = vmatprep.subr.mxu0 0.0
    %127 = vmatpush1.msra.mxu0 %v67
    %128 = vmatprep.subr.mxu0 0.0
    %129 = vmatpush1.msra.mxu0 %v68
    %130 = vmatprep.subr.mxu0 0.0
    %131 = vmatpush1.msra.mxu0 %v69
    %132 = vmatprep.subr.mxu0 0.0
    %133 = vmatpush1.msra.mxu0 %v70
    %134 = vmatprep.subr.mxu0 0.0
    %135 = vmatpush1.msra.mxu0 %v71
    %136 = vmatprep.subr.mxu0 0.0
    %137 = vmatpush1.msra.mxu0 %v72
    %138 = vmatprep.subr.mxu0 0.0
    %139 = vmatpush1.msra.mxu0 %v73
    %140 = vmatprep.subr.mxu0 0.0
    %141 = vmatpush1.msra.mxu0 %v74
    %142 = vmatprep.subr.mxu0 0.0
    %143 = vmatpush1.msra.mxu0 %v75
    %144 = vmatprep.subr.mxu0 0.0
    %145 = vmatpush1.msra.mxu0 %v76
    %146 = vmatprep.subr.mxu0 0.0
    %147 = vmatpush1.msra.mxu0 %v77
    %148 = vmatprep.subr.mxu0 0.0
    %149 = vmatpush1.msra.mxu0 %v78
    %150 = vmatprep.mubr.f32.mxu0 %v44
    %151 = vmatmul.mubr.f32.gmra.mrb[0].mxu0 %v43
    %v152 = vpop.f32.mrb[0].mxu0
    %v153 = vadd.f32 %v84, %v152
    %v154 = vpop.f32.mrb[0].mxu0
    %155 = vmatprep.mubr.f32.mxu0 %v46
    %156 = vmatmul.mubr.f32.gmra.mrb[0].mxu0 %v45
    %v157 = vpop.f32.mrb[0].mxu0
    %v158 = vadd.f32 %v84, %v157
    %v159 = vpop.f32.mrb[0].mxu0
    %160 = vdwg.mxu0
    %161 = vst [vmem:[#allocation7] sm:$0xff] %v153
    %162 = vst [vmem:[#allocation7 + $0x8] sm:$0xff] %v158
    // Predicated region
    $region22: #{_linear.1} parent=1 // pred_check
      _
    $region23: #{_linear.1} parent=1 // pred_check_branch
      %164 = sbr.rel (0) target = $region25
    $region24: #{_linear.1} parent=1 // pred_region
      %s166 = ssub.s32 256, 256
      %167 = vsyncadd [#allocation4], %s166
      %s168 = sshll.u32 [#allocation7], 4
      %s169 = int_to_ptr.vmem [resolvable:$true] %s168
      %174 = dma.vmem_to_hbm [thread:$0]  %s169, 256, %s3, [#allocation4], 128, 128, 8
    $region25: #{_linear.1} parent=1 // pred_fallthru
      _
    // Predicated region
    $region26: #{_linear.1} parent=1 // pred_check
      _
    $region27: #{_linear.1} parent=1 // pred_check_branch
      %176 = sbr.rel (0) target = $region29
    $region28: #{_linear.1} parent=1 // pred_region
      %177 = dma.done [#allocation4], 256
    $region29: #{_linear.1} parent=1 // pred_fallthru
      _
    %178 = vsyncpa [#allocation3], 1
    %179 = vsyncpa [#allocation6], 1
    %180 = vsyncpa [#allocation4], 1

</llo_original>
